<compile_context>
chip_gen: v7x
topology: tpu7x:2x2x1
jax: 0.10.0
libtpu: 0.0.40
codegen_flags: <defaults>
</compile_context>

<pallas_src>
import functools

import jax
import jax.numpy as jnp
from jax.experimental import pallas as pl
from jax.experimental.pallas import tpu as pltpu


def _round_up(a: int, b: int) -> int:
    return (a + b - 1) // b * b


def _cdiv(a: int, b: int) -> int:
    return (a + b - 1) // b


def _focal_loss_kernel(x_ref, lbl_ref, out_ref, acc_ref, *,
                       gamma, hw, tile_hw, tiles_per_split):
    """Grid step (b, s, t): one (C, tile_hw) slab of logits.

    b: batch row, s: spatial split (TensorCore parallelism), t: tile within split.
    Class axis C sits on sublanes; the lane-dense spatial tile (multiple of 128) on lanes.
    """
    t = pl.program_id(2)

    @pl.when(t == 0)
    def _():
        acc_ref[...] = jnp.zeros_like(acc_ref)

    x = x_ref[...].astype(jnp.float32)              # (C, T); bf16 logits cast in-kernel
    lbl = lbl_ref[...].astype(jnp.int32)            # (1, T); int8/int16 labels upcast in-kernel
    C, T = x.shape

    # Numerically stable log-softmax pieces along the class (sublane) axis.
    m = jnp.max(x, axis=0, keepdims=True)           # (1, T)
    z = x - m
    denom = jnp.sum(jnp.exp(z), axis=0, keepdims=True)
    log_denom = jnp.log(denom)                      # (1, T)

    # Select the label row without materializing a one-hot tensor in HBM.
    cls = jax.lax.broadcasted_iota(jnp.int32, (C, T), 0)
    z_lbl = jnp.sum(jnp.where(cls == lbl, z, 0.0), axis=0, keepdims=True)   # (1, T)

    ce = log_denom - z_lbl                          # -log_softmax at the label, >= 0
    pt = jnp.exp(-ce)                               # softmax prob at the label (hard targets)
    f = jnp.maximum(1.0 - pt, 0.0)                  # clamp: pt may round slightly above 1

    # Focal term: integer gamma -> repeated multiply (VPU); otherwise pow (EUP log+exp).
    # Note: gamma is assumed >= 0 (pow(0, gamma<0) would be inf).
    if float(gamma) == int(gamma) and 0 <= int(gamma) <= 8:
        g = int(gamma)
        if g == 0:
            focal = jnp.ones_like(f)
        else:
            focal = f
            for _ in range(g - 1):
                focal = focal * f
    else:
        focal = f ** jnp.float32(gamma)

    # Single combined mask (applied to the FINAL product only): lanes past the true
    # spatial extent (ragged last tile / clamped duplicate tiles read garbage logits)
    # and negative (ignored) labels.
    tile_idx = pl.program_id(1) * tiles_per_split + t
    lane = jax.lax.broadcasted_iota(jnp.int32, (1, T), 1)
    valid = ((tile_idx * tile_hw + lane) < hw) & (lbl >= 0)

    # Cheap elementwise (VPU) accumulation; the cross-lane reduce happens only once
    # per (batch, split) in the epilogue.
    acc_ref[...] = acc_ref[...] + jnp.where(valid, focal * ce, 0.0)

    @pl.when(t == pl.num_programs(2) - 1)
    def _():
        out_ref[...] = jnp.sum(acc_ref[...], keepdims=True)   # (1, 1) partial sum


def focal_loss(y_hat, labels, *, gamma=2.0, reduction="mean", target_tile_hw=8192):
    """Focal loss for (B, C, *spatial) logits and integer class labels (B, *spatial).

    Matches the PyTorch module's forward arithmetic for hard (class-index / one-hot)
    targets with weight=None. Negative labels contribute 0 (the mean still divides by
    the total element count, matching CrossEntropyLoss(reduction='none').mean()).
    Soft (probability) targets are NOT supported by this path (pt = exp(-ce) is only
    exact for hard targets).

    Perf: pass bf16 logits and int8/int16 labels to cut HBM traffic — both are upcast
    in-kernel; no wrapper-side casts or pads are added.
    """
    # TODO(synk): class weights (alpha), reduction='none' (per-position output), soft
    # probability targets and a positive ignore_index are not wired through the kernel.
    assert reduction in ("mean", "sum")
    B, C = int(y_hat.shape[0]), int(y_hat.shape[1])
    spatial = tuple(int(d) for d in y_hat.shape[2:])
    HW = 1
    for d in spatial:
        HW *= d
    assert labels.shape == (B,) + spatial

    # Contiguous views only: no transposes, no padding, no extra HBM passes.
    x = y_hat.reshape(B, C, HW)
    lbl = labels.reshape(B, 1, HW)
    if (not jnp.issubdtype(lbl.dtype, jnp.integer)) or lbl.dtype.itemsize > 4:
        lbl = lbl.astype(jnp.int32)     # e.g. int64 under x64: class ids fit in int32

    # ---- generation-aware tile / VMEM sizing -------------------------------------
    try:
        vmem_cap = int(getattr(pltpu.get_tpu_info(), "vmem_capacity_bytes", 64 << 20))
    except Exception:
        vmem_cap = 64 << 20
    big_vmem = vmem_cap >= (100 << 20)               # v5e/v6e: 128 MiB; v7x: 64 MiB
    vmem_limit = (96 << 20) if big_vmem else (32 << 20)
    budget = (vmem_limit * 3) // 4                   # headroom for compiler scratch

    c_pad = _round_up(C, 8)
    x_item = x.dtype.itemsize

    def _tile_bytes(t):
        inputs = 2 * (c_pad * x_item + 32) * t       # double-buffered logits + label row
        interm = 5 * c_pad * 4 * t                   # f32/i32 (C, T) body temporaries
        return inputs + interm + 4 * t               # + per-lane f32 accumulator

    tile_hw = min(_round_up(target_tile_hw, 128), _round_up(HW, 128))
    while tile_hw > 128 and _tile_bytes(tile_hw) > budget:
        tile_hw -= 128

    # ---- grid: (batch, spatial split, tiles); reduction axis last ------------------
    # The extra 'parallel' split axis gives v7x's second TensorCore spatial work even
    # when B is 1 / odd; it is a no-op on single-core v5e/v6e.
    n_tiles = _cdiv(HW, tile_hw)
    n_splits = 2 if n_tiles >= 2 else 1
    tiles_per_split = _cdiv(n_tiles, n_splits)

    def _in_map(b, s, t):
        # Clamp so the duplicate step of an odd split never issues an OOB DMA; the
        # duplicated lanes are masked out in-kernel via the lane-validity mask.
        return (b, 0, jnp.minimum(s * tiles_per_split + t, n_tiles - 1))

    x_spec_args = ((None, C, tile_hw), _in_map)
    try:
        if tile_hw <= 512 and B * n_splits * tiles_per_split >= 4 and hasattr(pl, "Buffered"):
            # Small/strided per-step transfers: deeper buffering hides DMA issue latency.
            x_spec = pl.BlockSpec(*x_spec_args, pipeline_mode=pl.Buffered(3))
        else:
            x_spec = pl.BlockSpec(*x_spec_args)
    except TypeError:                                # older Pallas without pipeline_mode
        x_spec = pl.BlockSpec(*x_spec_args)
    lbl_spec = pl.BlockSpec((None, 1, tile_hw), _in_map)

    kernel = functools.partial(_focal_loss_kernel, gamma=gamma, hw=HW,
                               tile_hw=tile_hw, tiles_per_split=tiles_per_split)

    partial_sums = pl.pallas_call(
        kernel,
        out_shape=jax.ShapeDtypeStruct((B, n_splits, 1, 1), jnp.float32),
        grid_spec=pltpu.PrefetchScalarGridSpec(
            num_scalar_prefetch=0,
            grid=(B, n_splits, tiles_per_split),
            in_specs=[x_spec, lbl_spec],
            out_specs=pl.BlockSpec((None, None, 1, 1), lambda b, s, t: (b, s, 0, 0)),
            scratch_shapes=[pltpu.VMEM((1, tile_hw), jnp.float32)],
        ),
        compiler_params=pltpu.CompilerParams(
            dimension_semantics=("parallel", "parallel", "arbitrary"),
            vmem_limit_bytes=vmem_limit,
        ),
    )(x, lbl)

    total = jnp.sum(partial_sums)                    # tiny combine of per-(b, split) partials
    if reduction == "mean":
        total = total * (1.0 / (B * HW))
    return total


def _focal_loss_ref(y_hat, labels, gamma=2.0):
    """Pure-JAX reference mirroring the PyTorch forward (hard targets, reduction='mean')."""
    C = y_hat.shape[1]
    y = jax.nn.one_hot(labels, C, axis=1, dtype=jnp.float32)    # (B, C, *spatial)
    logp = jax.nn.log_softmax(y_hat, axis=1)
    p = jax.nn.softmax(y_hat, axis=1)
    ce = -jnp.sum(y * logp, axis=1)
    pt = jnp.sum(y * p, axis=1)
    loss = (1.0 - pt) ** gamma * ce
    return jnp.mean(loss)


if __name__ == "__main__":
    key = jax.random.PRNGKey(0)
    k1, k2 = jax.random.split(key)

    B, C, H, W = 2, 4, 16, 16
    y_hat = jax.random.normal(k1, (B, C, H, W), dtype=jnp.float32)
    labels = jax.random.randint(k2, (B, H, W), 0, C)

    loss = focal_loss(y_hat, labels, gamma=2.0, reduction="mean")
    loss = jax.block_until_ready(loss)

    ref = _focal_loss_ref(y_hat, labels, gamma=2.0)
    assert jnp.allclose(loss, ref, rtol=1e-5, atol=1e-6), (loss, ref)

    print("KERNEL_OK")
</pallas_src>

<mosaic_0001>
module attributes {stable_mosaic.version = 11 : i64} {
  func.func @_focal_loss_kernel(%arg0: i32, %arg1: i32, %arg2: i32, %arg3: memref<1x4x256xf32, #tpu.memory_space<vmem>>, %arg4: memref<1x1x256xi32, #tpu.memory_space<vmem>>, %arg5: memref<1x1x1x1xf32, #tpu.memory_space<vmem>>, %arg6: memref<1x256xf32, #tpu.memory_space<vmem>>) attributes {dimension_semantics = [#tpu.dimension_semantics<parallel>, #tpu.dimension_semantics<parallel>, #tpu.dimension_semantics<arbitrary>], iteration_bounds = array<i64: 2, 1, 1>, scalar_prefetch = 0 : i64, scratch_operands = 1 : i64, tpu.core_type = #tpu.core_type<tc>, window_params = [{transform_indices = @transform_0, window_bounds = array<i64: 1, 4, 256>}, {transform_indices = @transform_1, window_bounds = array<i64: 1, 1, 256>}, {transform_indices = @transform_2, window_bounds = array<i64: 1, 1, 1, 1>}]} {
    %c0_i32 = arith.constant 0 : i32
    %0 = arith.cmpi eq, %arg2, %c0_i32 : i32
    %1 = arith.extui %0 : i1 to i32
    %c0_i32_0 = arith.constant 0 : i32
    %2 = arith.cmpi ne, %1, %c0_i32_0 : i32
    scf.if %2 {
      %cst_21 = arith.constant 0.000000e+00 : f32
      %51 = vector.broadcast %cst_21 : f32 to vector<1x256xf32>
      %c0_22 = arith.constant 0 : index
      %c0_23 = arith.constant 0 : index
      %52 = vector.load %arg6[%c0_22, %c0_23] : memref<1x256xf32, #tpu.memory_space<vmem>>, vector<1x256xf32>
      tpu.vector_store %arg6[%c0_22, %c0_23], %51 {strides = array<i32>} : memref<1x256xf32, #tpu.memory_space<vmem>>, vector<1x256xf32>,
    } else {
    }
    %c0 = arith.constant 0 : index
    %c0_1 = arith.constant 0 : index
    %c0_2 = arith.constant 0 : index
    %3 = vector.load %arg3[%c0, %c0_1, %c0_2] : memref<1x4x256xf32, #tpu.memory_space<vmem>>, vector<1x4x256xf32>
    %4 = vector.shape_cast %3 : vector<1x4x256xf32> to vector<4x256xf32>
    %c0_3 = arith.constant 0 : index
    %c0_4 = arith.constant 0 : index
    %c0_5 = arith.constant 0 : index
    %5 = vector.load %arg4[%c0_3, %c0_4, %c0_5] : memref<1x1x256xi32, #tpu.memory_space<vmem>>, vector<1x1x256xi32>
    %6 = vector.shape_cast %5 : vector<1x1x256xi32> to vector<1x256xi32>
    %cst = arith.constant dense<0xFF800000> : vector<256xf32>
    %7 = vector.multi_reduction <maximumf>, %4, %cst [0] : vector<4x256xf32> to vector<256xf32>
    %8 = vector.shape_cast %7 : vector<256xf32> to vector<1x256xf32>
    %9 = vector.broadcast %8 : vector<1x256xf32> to vector<4x256xf32>
    %10 = arith.subf %4, %9 : vector<4x256xf32>
    %11 = math.exp %10 : vector<4x256xf32>
    %cst_6 = arith.constant dense<0.000000e+00> : vector<256xf32>
    %12 = vector.multi_reduction <add>, %11, %cst_6 [0] : vector<4x256xf32> to vector<256xf32>
    %13 = vector.shape_cast %12 : vector<256xf32> to vector<1x256xf32>
    %14 = math.log %13 : vector<1x256xf32>
    %15 = tpu.iota {dimensions = array<i32: 0>} : vector<4x256xi32>
    %16 = vector.broadcast %6 : vector<1x256xi32> to vector<4x256xi32>
    %17 = arith.cmpi eq, %15, %16 : vector<4x256xi32>
    %cst_7 = arith.constant 0.000000e+00 : f32
    %18 = vector.broadcast %cst_7 : f32 to vector<4x256xf32>
    %19 = arith.select %17, %10, %18 : vector<4x256xi1>, vector<4x256xf32>
    %cst_8 = arith.constant dense<0.000000e+00> : vector<256xf32>
    %20 = vector.multi_reduction <add>, %19, %cst_8 [0] : vector<4x256xf32> to vector<256xf32>
    %21 = vector.shape_cast %20 : vector<256xf32> to vector<1x256xf32>
    %22 = arith.subf %14, %21 : vector<1x256xf32>
    %cst_9 = arith.constant 0.000000e+00 : f32
    %23 = vector.broadcast %cst_9 : f32 to vector<1x256xf32>
    %24 = arith.subf %23, %22 : vector<1x256xf32>
    %25 = math.exp %24 : vector<1x256xf32>
    %cst_10 = arith.constant 1.000000e+00 : f32
    %26 = vector.broadcast %cst_10 : f32 to vector<1x256xf32>
    %27 = arith.subf %26, %25 : vector<1x256xf32>
    %cst_11 = arith.constant 0.000000e+00 : f32
    %28 = vector.broadcast %cst_11 : f32 to vector<1x256xf32>
    %29 = arith.maximumf %27, %28 : vector<1x256xf32>
    %30 = arith.mulf %29, %29 : vector<1x256xf32>
    %c1_i32 = arith.constant 1 : i32
    %31 = arith.muli %arg1, %c1_i32 : i32
    %32 = arith.addi %31, %arg2 : i32
    %33 = tpu.iota {dimensions = array<i32: 1>} : vector<1x256xi32>
    %c256_i32 = arith.constant 256 : i32
    %34 = arith.muli %32, %c256_i32 : i32
    %35 = vector.broadcast %34 : i32 to vector<1x256xi32>
    %36 = arith.addi %35, %33 : vector<1x256xi32>
    %c256_i32_12 = arith.constant 256 : i32
    %37 = vector.broadcast %c256_i32_12 : i32 to vector<1x256xi32>
    %38 = arith.cmpi slt, %36, %37 : vector<1x256xi32>
    %c0_i32_13 = arith.constant 0 : i32
    %39 = vector.broadcast %c0_i32_13 : i32 to vector<1x256xi32>
    %40 = arith.cmpi sge, %6, %39 : vector<1x256xi32>
    %41 = arith.andi %38, %40 : vector<1x256xi1>
    %c0_14 = arith.constant 0 : index
    %c0_15 = arith.constant 0 : index
    %42 = vector.load %arg6[%c0_14, %c0_15] : memref<1x256xf32, #tpu.memory_space<vmem>>, vector<1x256xf32>
    %43 = arith.mulf %30, %22 : vector<1x256xf32>
    %cst_16 = arith.constant 0.000000e+00 : f32
    %44 = vector.broadcast %cst_16 : f32 to vector<1x256xf32>
    %45 = arith.select %41, %43, %44 : vector<1x256xi1>, vector<1x256xf32>
    %46 = arith.addf %42, %45 : vector<1x256xf32>
    %c0_17 = arith.constant 0 : index
    %c0_18 = arith.constant 0 : index
    %47 = vector.load %arg6[%c0_17, %c0_18] : memref<1x256xf32, #tpu.memory_space<vmem>>, vector<1x256xf32>
    tpu.vector_store %arg6[%c0_17, %c0_18], %46 {strides = array<i32>} : memref<1x256xf32, #tpu.memory_space<vmem>>, vector<1x256xf32>,
    %c0_i32_19 = arith.constant 0 : i32
    %48 = arith.cmpi eq, %arg2, %c0_i32_19 : i32
    %49 = arith.extui %48 : i1 to i32
    %c0_i32_20 = arith.constant 0 : i32
    %50 = arith.cmpi ne, %49, %c0_i32_20 : i32
    scf.if %50 {
      %c0_21 = arith.constant 0 : index
      %c0_22 = arith.constant 0 : index
      %51 = vector.load %arg6[%c0_21, %c0_22] : memref<1x256xf32, #tpu.memory_space<vmem>>, vector<1x256xf32>
      %52 = vector.shape_cast %51 : vector<1x256xf32> to vector<1x1x256xf32>
      %cst_23 = arith.constant dense<0.000000e+00> : vector<1xf32>
      %53 = vector.multi_reduction <add>, %52, %cst_23 [1, 2] : vector<1x1x256xf32> to vector<1xf32>
      %54 = vector.shape_cast %53 : vector<1xf32> to vector<1x1x1xf32>
      %55 = vector.extract %54[0, 0, 0] : f32 from vector<1x1x1xf32>
      %56 = vector.broadcast %55 : f32 to vector<1x1xf32>
      %c0_24 = arith.constant 0 : index
      %c0_25 = arith.constant 0 : index
      %c0_26 = arith.constant 0 : index
      %c0_27 = arith.constant 0 : index
      %57 = vector.load %arg5[%c0_24, %c0_25, %c0_26, %c0_27] : memref<1x1x1x1xf32, #tpu.memory_space<vmem>>, vector<1x1x1x1xf32>
      %58 = vector.shape_cast %57 : vector<1x1x1x1xf32> to vector<1x1xf32>
      %59 = vector.shape_cast %56 : vector<1x1xf32> to vector<1x1x1x1xf32>
      tpu.vector_store %arg5[%c0_24, %c0_25, %c0_26, %c0_27], %59 {strides = array<i32>} : memref<1x1x1x1xf32, #tpu.memory_space<vmem>>, vector<1x1x1x1xf32>,
    } else {
    }
    return
  }
  func.func @transform_0(%arg0: i32, %arg1: i32, %arg2: i32) -> (i32, i32, i32) {
    %c1_i32 = arith.constant 1 : i32
    %0 = arith.muli %arg1, %c1_i32 : i32
    %1 = arith.addi %0, %arg2 : i32
    %c0_i32 = arith.constant 0 : i32
    %2 = arith.minsi %1, %c0_i32 : i32
    %c0_i32_0 = arith.constant 0 : i32
    %c0_i32_1 = arith.constant 0 : i32
    return %arg0, %c0_i32_0, %2 : i32, i32, i32
  }
  func.func @transform_1(%arg0: i32, %arg1: i32, %arg2: i32) -> (i32, i32, i32) {
    %c1_i32 = arith.constant 1 : i32
    %0 = arith.muli %arg1, %c1_i32 : i32
    %1 = arith.addi %0, %arg2 : i32
    %c0_i32 = arith.constant 0 : i32
    %2 = arith.minsi %1, %c0_i32 : i32
    %c0_i32_0 = arith.constant 0 : i32
    %c0_i32_1 = arith.constant 0 : i32
    return %arg0, %c0_i32_0, %2 : i32, i32, i32
  }
  func.func @transform_2(%arg0: i32, %arg1: i32, %arg2: i32) -> (i32, i32, i32, i32) {
    %c0_i32 = arith.constant 0 : i32
    %c0_i32_0 = arith.constant 0 : i32
    %c0_i32_1 = arith.constant 0 : i32
    return %arg0, %arg1, %c0_i32, %c0_i32_0 : i32, i32, i32, i32
  }
}

</mosaic_0001>

<llo_original>
// kernel: tpu_custom_call.1
$region0: #{tpu_custom_call.1}
  #allocation0 [shape = 'u32[]', space=smem, size = 0x4, offset = 0x4, fixed_abs, tag = 'smem constant byte address 0x4 - core index']
  #allocation1 [shape = 'u32[144,128]{1,0:T(1,128)}', space=vmem, size = 0x12000, scoped, tag = 'internal scratch']
  #allocation2 [shape = 'f32[1,256]{1,0:T(1,128)}', space=vmem, size = 0x400, scoped, tag = 'scratch operand']
  %s0 = inlined_call_operand.hbm [shape: f32[2,4,256], index: 0, kind: input, shape index: {}]
  %s1 = inlined_call_operand.hbm [shape: s32[2,1,256], index: 1, kind: input, shape index: {}]
  %s2 = inlined_call_operand.vmem [shape: f32[2,1,1,1], index: 2, kind: output, shape index: {}]
  %s3 = sld [smem:[#allocation0]]
  $region57: #{tpu_custom_call.1} parent=0
    _
  %s5 = ssub.s32 1, %s3
  %s6 = scalar_select 0, %s5, %s3
  $region1: #{tpu_custom_call.1} parent=0
    #allocation3 [shape = 'u8[8192]{0}', space=vmem, size = 0x2000, scoped, tag = 'input window, operand 0']
    #allocation4 [shape = 's32[2]{0}', space=sflag, size = 0x8, scoped, tag = 'scoped memory for tpu_custom_call.1']
    #allocation5 [shape = 'u8[2048]{0}', space=vmem, size = 0x800, scoped, tag = 'input window, operand 1']
    #allocation6 [shape = 's32[2]{0}', space=sflag, size = 0x8, scoped, tag = 'scoped memory for tpu_custom_call.1']
    %7 = vsyncpa [#allocation4], 0
    %s8 = scalar_lea.sflag [#allocation4], 1
    %9 = vsyncpa %s8, 0
    %10 = vsyncpa [#allocation6], 0
    %s11 = scalar_lea.sflag [#allocation6], 1
    %12 = vsyncpa %s11, 0
    loop: start=0, step=1, limit=4
    $region2: #{tpu_custom_call.1} parent=1 // loop_pre_header
      _
    $region3: #{tpu_custom_call.1} parent=1 // loop_header
      %s14 = sphi 0, %s18
      %p15 = scmp.ge.s32.totalorder %s14, 4
      %s21 = sphi 0, %s40
      %s22 = sphi 0, %s36
      %s23 = sphi 0, %s32
      %s24 = sphi 0, %s21
      %s25 = sphi 0, %s22
      %s26 = sphi 0, %s23
      %s27 = sphi 0, %s24
      %s28 = sphi 0, %s25
      %s29 = sphi 0, %s26
      %s51 = sphi 0, %s53
      %s54 = sphi 0, %s51
      %s55 = sphi 0, %s54
      %s71 = sphi 0, %s55
      %s85 = sphi 0, %s87
      %s88 = sphi 0, %s85
      %s89 = sphi 0, %s88
      %s105 = sphi 0, %s89
      %s113 = sphi 0, %s115
      %s116 = sphi 0, %s113
      %s117 = sphi 0, %s116
      %s133 = sphi 0, %s117
    $region4: #{tpu_custom_call.1} parent=1 // loop_header_branch
      %17 = sbr.rel (%p15) target = $region8
    $region5: #{tpu_custom_call.1} parent=1 // loop_body
      %s19 = ssub.s32 %s14, 1
      %s20 = ssub.s32 %s14, 2
      %s30 = sadd.s32 1, %s23
      %p31 = scmp.ge.s32.totalorder %s30, 1
      %s32 = scalar_select %p31, 0, %s30
      %s33 = sadd.s32 1, %s22
      %s34 = scalar_select %p31, %s33, %s22
      %p35 = scmp.ge.s32.totalorder %s34, 1
      %s36 = scalar_select %p35, 0, %s34
      %s37 = sadd.s32 1, %s21
      %s38 = scalar_select %p35, %s37, %s21
      %p39 = scmp.ge.s32.totalorder %s38, 2
      %s40 = scalar_select %p39, 0, %s38
      %s41 = sadd.s32 %s22, %s23
      %p42 = scmp.lt.s32.totalorder %s41, 0
      %s43 = scalar_select %p42, %s41, 0
      %s44 = sadd.s32 %s36, %s32
      %p45 = scmp.lt.s32.totalorder %s44, 0
      %s46 = scalar_select %p45, %s44, 0
      %s47 = ssub.s32 %s21, %s40
      %s48 = ssub.s32 %s43, %s46
      %s49 = sor.u32 %s47, %s48
      %p50 = scmp.eq.s32.totalorder %s49, 0
      %s52 = sadd.s32 %s51, 1
      %s53 = scalar_select %p50, %s51, %s52
      %p56 = pneg %p50
      %p57 = scmp.eq.s32.totalorder %s14, 1
      %p58 = por %p56, %p57
      %p59 = scmp.ne.s32.totalorder %s51, %s54
      %p60 = scmp.eq.s32.totalorder %s14, 0
      %p61 = por %p59, %p60
      %p62 = scmp.ne.s32.totalorder %s51, %s54
      %p63 = scmp.eq.s32.totalorder %s19, 1
      %p64 = por %p62, %p63
      %p65 = scmp.ne.s32.totalorder %s54, %s55
      %p66 = scmp.eq.s32.totalorder %s19, 0
      %p67 = por %p65, %p66
      %p68 = scmp.ne.s32.totalorder %s54, %s55
      %p69 = scmp.eq.s32.totalorder %s20, 1
      %p70 = por %p68, %p69
      %p72 = scmp.ne.s32.totalorder %s55, %s71
      %p73 = scmp.eq.s32.totalorder %s20, 0
      %p74 = por %p72, %p73
      %s75 = sadd.s32 %s22, %s23
      %p76 = scmp.lt.s32.totalorder %s75, 0
      %s77 = scalar_select %p76, %s75, 0
      %s78 = sadd.s32 %s36, %s32
      %p79 = scmp.lt.s32.totalorder %s78, 0
      %s80 = scalar_select %p79, %s78, 0
      %s81 = ssub.s32 %s21, %s40
      %s82 = ssub.s32 %s77, %s80
      %s83 = sor.u32 %s81, %s82
      %p84 = scmp.eq.s32.totalorder %s83, 0
      %s86 = sadd.s32 %s85, 1
      %s87 = scalar_select %p84, %s85, %s86
      %p90 = pneg %p84
      %p91 = scmp.eq.s32.totalorder %s14, 1
      %p92 = por %p90, %p91
      %p93 = scmp.ne.s32.totalorder %s85, %s88
      %p94 = scmp.eq.s32.totalorder %s14, 0
      %p95 = por %p93, %p94
      %p96 = scmp.ne.s32.totalorder %s85, %s88
      %p97 = scmp.eq.s32.totalorder %s19, 1
      %p98 = por %p96, %p97
      %p99 = scmp.ne.s32.totalorder %s88, %s89
      %p100 = scmp.eq.s32.totalorder %s19, 0
      %p101 = por %p99, %p100
      %p102 = scmp.ne.s32.totalorder %s88, %s89
      %p103 = scmp.eq.s32.totalorder %s20, 1
      %p104 = por %p102, %p103
      %p106 = scmp.ne.s32.totalorder %s89, %s105
      %p107 = scmp.eq.s32.totalorder %s20, 0
      %p108 = por %p106, %p107
      %s109 = ssub.s32 %s21, %s40
      %s110 = ssub.s32 %s22, %s36
      %s111 = sor.u32 %s109, %s110
      %p112 = scmp.eq.s32.totalorder %s111, 0
      %s114 = sadd.s32 %s113, 1
      %s115 = scalar_select %p112, %s113, %s114
      %p118 = pneg %p112
      %p119 = scmp.eq.s32.totalorder %s14, 1
      %p120 = por %p118, %p119
      %p121 = scmp.ne.s32.totalorder %s113, %s116
      %p122 = scmp.eq.s32.totalorder %s14, 0
      %p123 = por %p121, %p122
      %p124 = scmp.ne.s32.totalorder %s113, %s116
      %p125 = scmp.eq.s32.totalorder %s19, 1
      %p126 = por %p124, %p125
      %p127 = scmp.ne.s32.totalorder %s116, %s117
      %p128 = scmp.eq.s32.totalorder %s19, 0
      %p129 = por %p127, %p128
      %p130 = scmp.ne.s32.totalorder %s116, %s117
      %p131 = scmp.eq.s32.totalorder %s20, 1
      %p132 = por %p130, %p131
      %p134 = scmp.ne.s32.totalorder %s117, %s133
      %p135 = scmp.eq.s32.totalorder %s20, 0
      %p136 = por %p134, %p135
      %p137 = scmp.le.s32.totalorder 1, %s14
      %p138 = scmp.lt.s32.totalorder %s14, 3
      %p139 = pnand %p137, %p138
      %p140 = pneg %p139
      // Predicated region
      $region9: #{tpu_custom_call.1} parent=5 // pred_check
        _
      $region10: #{tpu_custom_call.1} parent=5 // pred_check_branch
        %142 = sbr.rel (%p139) target = $region12
      $region11: #{tpu_custom_call.1} parent=5 // pred_region
        %s143 = ssub.s32 %s14, 1
      $region12: #{tpu_custom_call.1} parent=5 // pred_fallthru
        _
      %p144 = scmp.lt.s32.totalorder %s14, 2
      // Predicated region
      $region13: #{tpu_custom_call.1} parent=5 // pred_check
        %p145 = pneg %p144
      $region14: #{tpu_custom_call.1} parent=5 // pred_check_branch
        %147 = sbr.rel (%p145) target = $region16
      $region15: #{tpu_custom_call.1} parent=5 // pred_region
        // Predicated region
        $region17: #{tpu_custom_call.1} parent=15 // pred_check
          %p148 = pneg %p61
        $region18: #{tpu_custom_call.1} parent=15 // pred_check_branch
          %150 = sbr.rel (%p148) target = $region20
        $region19: #{tpu_custom_call.1} parent=15 // pred_region
          %s151 = sand.u32 %s51, 1
          %s152 = scalar_lea.sflag [#allocation4], %s151
          %s153 = sand.u32 %s51, 1
          %s154 = smul.addr %s153, 8
          %s155 = scalar_lea.vmem [#allocation3], %s154
          %s156 = sadd.s32 %s22, %s23
          %p157 = scmp.lt.s32.totalorder %s156, 0
          %s158 = scalar_select %p157, %s156, 0
          %s159 = smul.u32 2, %s158
          %s161 = ssub.s32 128, 128
          %162 = vsyncadd %s152, %s161
          %s163 = smul.addr %s21, 2
          %s164 = sadd.s32 %s159, %s163
          %s165 = smul.addr %s164, 64
          %s166 = scalar_lea.hbm %s0, %s165
          %s168 = sshll.u32 %s155, 4
          %s169 = int_to_ptr.vmem [resolvable:$true] %s168
          %171 = dma.hbm_to_vmem [thread:$0]  %s166, 128, %s169, %s152
        $region20: #{tpu_custom_call.1} parent=15 // pred_fallthru
          _
        // Predicated region
        $region21: #{tpu_custom_call.1} parent=15 // pred_check
          %p172 = pneg %p95
        $region22: #{tpu_custom_call.1} parent=15 // pred_check_branch
          %174 = sbr.rel (%p172) target = $region24
        $region23: #{tpu_custom_call.1} parent=15 // pred_region
          %s175 = sand.u32 %s85, 1
          %s176 = scalar_lea.sflag [#allocation6], %s175
          %s177 = sand.u32 %s85, 1
          %s178 = smul.addr %s177, 2
          %s179 = scalar_lea.vmem [#allocation5], %s178
          %s180 = sadd.s32 %s22, %s23
          %p181 = scmp.lt.s32.totalorder %s180, 0
          %s182 = scalar_select %p181, %s180, 0
          %s183 = smul.u32 2, %s182
          %s185 = ssub.s32 32, 32
          %186 = vsyncadd %s176, %s185
          %s187 = smul.addr %s21, 2
          %s188 = sadd.s32 %s183, %s187
          %s189 = smul.addr %s188, 16
          %s190 = scalar_lea.hbm %s1, %s189
          %s192 = sshll.u32 %s179, 4
          %s193 = int_to_ptr.vmem [resolvable:$true] %s192
          %195 = dma.hbm_to_vmem [thread:$0]  %s190, 32, %s193, %s176
        $region24: #{tpu_custom_call.1} parent=15 // pred_fallthru
          _
      $region16: #{tpu_custom_call.1} parent=5 // pred_fallthru
        _
      %p196 = scmp.le.s32.totalorder 1, %s14
      %p197 = scmp.lt.s32.totalorder %s14, 3
      %p198 = pnand %p196, %p197
      %p199 = pneg %p198
      // Predicated region
      $region25: #{tpu_custom_call.1} parent=5 // pred_check
        _
      $region26: #{tpu_custom_call.1} parent=5 // pred_check_branch
        %201 = sbr.rel (%p198) target = $region28
      $region27: #{tpu_custom_call.1} parent=5 // pred_region
        %s202 = ssub.s32 %s14, 1
        %s203 = sand.u32 %s54, 1
        %s204 = scalar_lea.sflag [#allocation4], %s203
        %s205 = sand.u32 %s54, 1
        %s206 = smul.addr %s205, 8
        %s207 = scalar_lea.vmem [#allocation3], %s206
        // Predicated region
        $region29: #{tpu_custom_call.1} parent=27 // pred_check
          %p208 = pneg %p67
        $region30: #{tpu_custom_call.1} parent=27 // pred_check_branch
          %210 = sbr.rel (%p208) target = $region32
        $region31: #{tpu_custom_call.1} parent=27 // pred_region
          %211 = dma.done %s204, 128
        $region32: #{tpu_custom_call.1} parent=27 // pred_fallthru
          _
        %s212 = sand.u32 %s88, 1
        %s213 = scalar_lea.sflag [#allocation6], %s212
        %s214 = sand.u32 %s88, 1
        %s215 = smul.addr %s214, 2
        %s216 = scalar_lea.vmem [#allocation5], %s215
        // Predicated region
        $region33: #{tpu_custom_call.1} parent=27 // pred_check
          %p217 = pneg %p101
        $region34: #{tpu_custom_call.1} parent=27 // pred_check_branch
          %219 = sbr.rel (%p217) target = $region36
        $region35: #{tpu_custom_call.1} parent=27 // pred_region
          %220 = dma.done %s213, 32
        $region36: #{tpu_custom_call.1} parent=27 // pred_fallthru
          _
        %s221 = sand.u32 %s54, 1
        %s222 = scalar_lea.sflag [#allocation4], %s221
        %s223 = sand.u32 %s54, 1
        %s224 = smul.addr %s223, 8
        %s225 = scalar_lea.vmem [#allocation3], %s224
        %p226 = pneg %p67
        %p227 = pneg %p64
        %s228 = sand.u32 %s88, 1
        %s229 = scalar_lea.sflag [#allocation6], %s228
        %s230 = sand.u32 %s88, 1
        %s231 = smul.addr %s230, 2
        %s232 = scalar_lea.vmem [#allocation5], %s231
        %p233 = pneg %p101
        %p234 = pneg %p98
        %p235 = pneg %p129
        %p236 = pneg %p126
        %p237 = scmp.lt.s32.totalorder %s24, 1
        %s238 = scalar_select %p237, %s24, 1
        %p239 = scmp.lt.s32.totalorder %s25, 0
        %s240 = scalar_select %p239, %s25, 0
        %s241 = sadd.s32 %s240, %s238
        %s242 = scalar_lea.vmem %s2, %s241
        %s243 = sadd.s32 %s25, %s26
        %p244 = scmp.lt.s32.totalorder %s243, 0
        %s245 = scalar_select %p244, %s243, 0
        %s246 = smul.u32 2, %s245
        %s247 = sadd.s32 %s25, %s26
        %p248 = scmp.lt.s32.totalorder %s247, 0
        %s249 = scalar_select %p248, %s247, 0
        %s250 = smul.u32 2, %s249
        %p251 = scmp.lt.s32.totalorder %s24, 1
        %s252 = scalar_select %p251, %s24, 1
        %p253 = scmp.lt.s32.totalorder %s25, 0
        %s254 = scalar_select %p253, %s25, 0
        %s255 = sadd.s32 %s254, %s252
        %s256 = scalar_lea.vmem %s2, %s255
        %p257 = scmp.eq.s32.totalorder %s26, 0
        // Predicated region
        $region37: #{tpu_custom_call.1} parent=27 // pred_check
          %p258 = pneg %p257
        $region38: #{tpu_custom_call.1} parent=27 // pred_check_branch
          %260 = sbr.rel (%p258) target = $region40
        $region39: #{tpu_custom_call.1} parent=27 // pred_region
          %v261 = vlaneseq
          %vm262 = vcmp.ge.s32.totalorder %v261, 0
          %vm263 = vcmp.lt.s32.totalorder %v261, 256
          %vm264 = vmand %vm262, %vm263
          %265 = vst.msk [vmem:[#allocation2] sm:$0x3] %vm264, 0.0
        $region40: #{tpu_custom_call.1} parent=27 // pred_fallthru
          _
        %v266 = vld [vmem:[%s207] sm:$0xff]
        %v267 = vld [vmem:[%s216] sm:$0x3]
        %v269 = vcombine.high %v266, %v266
        %vm271 = vcmask 1043456
        %v272 = vsel %vm271, %v266, -inf
        %v273 = vrot.slane %v272, 4
        %v274 = vmax.f32 %v272, %v273
        %v275 = vrot.slane %v274, 2
        %v276 = vmax.f32 %v274, %v275
        %v277 = vrot.slane %v276, 1
        %v278 = vmax.f32 %v276, %v277
        %v279 = vsel %vm271, %v269, -inf
        %v280 = vrot.slane %v279, 4
        %v281 = vmax.f32 %v279, %v280
        %v282 = vrot.slane %v281, 2
        %v283 = vmax.f32 %v281, %v282
        %v284 = vrot.slane %v283, 1
        %v285 = vmax.f32 %v283, %v284
        %v288 = vcombine.low %v278, %v285
        %v290 = vsub.f32 %v266, %v288
        %v291 = vmul.f32 %v290, 1.442695
        %v292 = vpow.pop %v291
        %v294 = vcombine.high %v292, %v292
        %v296 = vsel %vm271, %v292, 0.0
        %v297 = vrot.slane %v296, 4
        %v298 = vadd.f32 %v296, %v297
        %v299 = vrot.slane %v298, 2
        %v300 = vadd.f32 %v298, %v299
        %v301 = vrot.slane %v300, 1
        %v302 = vadd.f32 %v300, %v301
        %v303 = vsel %vm271, %v294, 0.0
        %v304 = vrot.slane %v303, 4
        %v305 = vadd.f32 %v303, %v304
        %v306 = vrot.slane %v305, 2
        %v307 = vadd.f32 %v305, %v306
        %v308 = vrot.slane %v307, 1
        %v309 = vadd.f32 %v307, %v308
        %v310 = vlog2.pop %v302
        %v311 = vmul.f32 %v310, 0.6931472
        %v312 = vlog2.pop %v309
        %v313 = vmul.f32 %v312, 0.6931472
        %v314 = vlaneseq
        %v315 = vshrl.u32 %v314, 7
        %v316 = vlaneseq
        %v317 = vshrl.u32 %v316, 7
        %v318 = vsub.s32 0, %v317
        %v319 = vrot.slane %v267, %v318
        %v320 = vlaneseq
        %v321 = vshrl.u32 %v320, 7
        %v322 = vsub.s32 1, %v321
        %v323 = vrot.slane %v267, %v322
        %vm324 = vcmp.eq.s32.totalorder %v315, %v319
        %vm325 = vcmp.eq.s32.totalorder %v315, %v323
        %v327 = vcombine.high %v290, %v290
        %v329 = vsel %vm324, %v290, 0.0
        %v330 = vsel %vm325, %v327, 0.0
        %v331 = vsel %vm271, %v329, 0.0
        %v332 = vrot.slane %v331, 4
        %v333 = vadd.f32 %v331, %v332
        %v334 = vrot.slane %v333, 2
        %v335 = vadd.f32 %v333, %v334
        %v336 = vrot.slane %v335, 1
        %v337 = vadd.f32 %v335, %v336
        %v338 = vsel %vm271, %v330, 0.0
        %v339 = vrot.slane %v338, 4
        %v340 = vadd.f32 %v338, %v339
        %v341 = vrot.slane %v340, 2
        %v342 = vadd.f32 %v340, %v341
        %v343 = vrot.slane %v342, 1
        %v344 = vadd.f32 %v342, %v343
        %v345 = vsub.f32 %v311, %v337
        %v346 = vsub.f32 %v313, %v344
        %v347 = vsub.f32 0.0, %v345
        %v348 = vsub.f32 0.0, %v346
        %v349 = vmul.f32 %v347, 1.442695
        %v350 = vpow.pop %v349
        %v351 = vmul.f32 %v348, 1.442695
        %v352 = vpow.pop %v351
        %v353 = vsub.f32 1.0, %v350
        %v354 = vsub.f32 1.0, %v352
        %v355 = vmax.f32 %v353, 0.0
        %v356 = vmax.f32 %v354, 0.0
        %v357 = vmul.f32 %v355, %v355
        %v358 = vmul.f32 %v356, %v356
        %s359 = sadd.s32 %s25, %s26
        %v360 = vlaneseq
        %v361 = vand.u32 %v360, 127
        %v362 = vadd.s32 %v361, 128
        %s363 = smul.u32 %s359, 256
        %v364 = vstv %s363
        %v365 = vadd.s32 %v364, %v361
        %v366 = vadd.s32 %v364, %v362
        %vm367 = vcmp.lt.s32.totalorder %v365, 256
        %vm368 = vcmp.lt.s32.totalorder %v366, 256
        %vm369 = vcmp.ge.s32.totalorder %v267, 0
        %v370 = vsel %vm369, 1, 0
        %v371 = vlaneseq
        %v372 = vshrl.u32 %v371, 7
        %v373 = vsub.s32 0, %v372
        %v374 = vrot.slane %v370, %v373
        %v375 = vlaneseq
        %v376 = vshrl.u32 %v375, 7
        %v377 = vsub.s32 1, %v376
        %v378 = vrot.slane %v370, %v377
        %vm379 = vcmp.ne.s32.totalorder %v374, 0
        %vm380 = vcmp.ne.s32.totalorder %v378, 0
        %vm381 = vmand %vm367, %vm379
        %vm382 = vmand %vm368, %vm380
        %v383 = vld [vmem:[#allocation2] sm:$0x3]
        %v384 = vmul.f32 %v357, %v345
        %v385 = vmul.f32 %v358, %v346
        %v386 = vsel %vm381, %v384, 0.0
        %v387 = vsel %vm382, %v385, 0.0
        %v390 = vcombine.low %v386, %v387
        %v392 = vunpack.c.l.s4 1966171168
        %v393 = vunpack.c.0.s8 %v392
        %v394 = vlaneseq
        %v395 = vshrl.u32 %v394, 7
        %v396 = vsub.s32 %v393, %v395
        %v397 = vrot.slane %v390, %v396
        %v399 = vunpack.c.l.s4 1966171168
        %v400 = vunpack.c.0.s8 %v399
        %v401 = vlaneseq
        %v402 = vshrl.u32 %v401, 7
        %v403 = vsub.s32 %v400, %v402
        %v404 = vrot.slane %v397, %v403
        %v406 = vadd.f32 %v383, %v404
        %v407 = vlaneseq
        %vm408 = vcmp.ge.s32.totalorder %v407, 0
        %vm409 = vcmp.lt.s32.totalorder %v407, 256
        %vm410 = vmand %vm408, %vm409
        %411 = vst.msk [vmem:[#allocation2] sm:$0x3] %vm410, %v406
        // Predicated region
        $region41: #{tpu_custom_call.1} parent=27 // pred_check
          %p412 = pneg %p257
        $region42: #{tpu_custom_call.1} parent=27 // pred_check_branch
          %414 = sbr.rel (%p412) target = $region44
        $region43: #{tpu_custom_call.1} parent=27 // pred_region
          %v415 = vld [vmem:[#allocation2] sm:$0x3]
          %v417 = vlaneseq
          %v418 = vshrl.u32 %v417, 7
          %v419 = vsub.s32 0, %v418
          %v420 = vrot.slane %v415, %v419
          %v421 = vlaneseq
          %v422 = vshrl.u32 %v421, 7
          %v423 = vsub.s32 1, %v422
          %v424 = vrot.slane %v415, %v423
          %vm427 = vcmask 1040384
          %v428 = vsel %vm427, %v420, 0.0
          %v429 = vsel %vm427, %v424, 0.0
          %v430 = vadd.f32 %v428, %v429
          %431 = vadd.xlane.f32.xlu0 %v430
          %v432 = vpop.xlane.xlu0 %431
          %v433 = vrot.slane %v432, 4
          %v434 = vadd.f32 %v432, %v433
          %v435 = vrot.slane %v434, 2
          %v436 = vadd.f32 %v434, %v435
          %v437 = vrot.slane %v436, 1
          %v438 = vadd.f32 %v436, %v437
          %s439 = vtos %v438
          %v440 = vstv %s439
          %vm441 = vcmask 0
          %442 = vst.msk [vmem:[%s256] sm:$0x1] %vm441, %v440
        $region44: #{tpu_custom_call.1} parent=27 // pred_fallthru
          _
        %p443 = scmp.lt.s32.totalorder %s24, 1
        %s444 = scalar_select %p443, %s24, 1
        %p445 = scmp.lt.s32.totalorder %s25, 0
        %s446 = scalar_select %p445, %s25, 0
        %s447 = sadd.s32 %s446, %s444
        %s448 = scalar_lea.vmem %s2, %s447
        // Predicated region
        $region45: #{tpu_custom_call.1} parent=27 // pred_check
          %p449 = pneg %p126
        $region46: #{tpu_custom_call.1} parent=27 // pred_check_branch
          %451 = sbr.rel (%p449) target = $region48
        $region47: #{tpu_custom_call.1} parent=27 // pred_region
          _
        $region48: #{tpu_custom_call.1} parent=27 // pred_fallthru
          _
      $region28: #{tpu_custom_call.1} parent=5 // pred_fallthru
        _
      %p452 = scmp.le.s32.totalorder 2, %s14
      // Predicated region
      $region49: #{tpu_custom_call.1} parent=5 // pred_check
        %p453 = pneg %p452
      $region50: #{tpu_custom_call.1} parent=5 // pred_check_branch
        %455 = sbr.rel (%p453) target = $region52
      $region51: #{tpu_custom_call.1} parent=5 // pred_region
        %s456 = ssub.s32 %s14, 2
        // Predicated region
        $region53: #{tpu_custom_call.1} parent=51 // pred_check
          %p457 = pneg %p132
        $region54: #{tpu_custom_call.1} parent=51 // pred_check_branch
          %459 = sbr.rel (%p457) target = $region56
        $region55: #{tpu_custom_call.1} parent=51 // pred_region
          %p460 = scmp.lt.s32.totalorder %s27, 1
          %s461 = scalar_select %p460, %s27, 1
          %p462 = scmp.lt.s32.totalorder %s28, 0
          %s463 = scalar_select %p462, %s28, 0
          %s464 = sadd.s32 %s463, %s461
          %s465 = scalar_lea.vmem %s2, %s464
        $region56: #{tpu_custom_call.1} parent=51 // pred_fallthru
          _
      $region52: #{tpu_custom_call.1} parent=5 // pred_fallthru
        _
    $region6: #{tpu_custom_call.1} parent=1 // loop_footer
      %s18 = sadd.s32 1, %s14
    $region7: #{tpu_custom_call.1} parent=1 // loop_footer_branch
      %13 = sbr.rel target = $region3
    $region8: #{tpu_custom_call.1} parent=1 // loop_exit
      _
    %466 = vsyncpa [#allocation4], 1
    %s467 = scalar_lea.sflag [#allocation4], 1
    %468 = vsyncpa %s467, 1
    %469 = vsyncpa [#allocation6], 1
    %s470 = scalar_lea.sflag [#allocation6], 1
    %471 = vsyncpa %s470, 1

</llo_original>
